<compile_context>
chip_gen: v7x
topology: tpu7x:2x2x1
jax: 0.10.0
libtpu: 0.0.40
codegen_flags: <defaults>
</compile_context>

<pallas_src>
import functools
import math

import jax
import jax.numpy as jnp
from jax.experimental import pallas as pl
from jax.experimental.pallas import tpu as pltpu


def _round_up(x, m):
    return ((x + m - 1) // m) * m


def _lblm_kernel(x_ref, u_ref, bpe_ref, csum_ref, gain_ref, emb_ref, orig_ref,
                 *maybe_stats, patch_length, patch_stride, num_patches,
                 embed_dim, eps, use_rev_in):
    """One grid step processes TN rows: raw (TN, T) -> emb (TN, P*D)."""
    L, S, P, D = patch_length, patch_stride, num_patches, embed_dim
    stats_ref = maybe_stats[0] if use_rev_in else None

    xr = x_ref[...]                                   # (TN, T), input dtype
    x = xr.astype(jnp.float32)
    g = gain_ref[...].astype(jnp.float32)             # (TN, 1) subject gain

    # Original (unfolded) patches: static slices, one lane concat, ONE store.
    parts = [xr[:, p * S:p * S + L] for p in range(P)]
    orig_ref[...] = jnp.concatenate(parts, axis=-1).astype(orig_ref.dtype)

    # Single batched MXU matmul against the Toeplitz-unfolded weight.
    raw = jnp.dot(x, u_ref[...], preferred_element_type=jnp.float32)  # (TN,P*D)

    if use_rev_in:
        csum = csum_ref[...]                          # (1, D) column sums of W
        inv_den = 1.0 / max(L - 1, 1)                 # unbiased std; guard L==1
        means, stds, a_parts, c_parts = [], [], [], []
        # NOTE: P is small here; for long recordings chunk the patch axis into
        # a second grid dim to bound live ranges and U's VMEM footprint.
        for p in range(P):
            xp = parts[p].astype(jnp.float32)                         # (TN, L)
            mu = jnp.mean(xp, axis=-1, keepdims=True)                 # (TN, 1)
            var = jnp.sum((xp - mu) ** 2, axis=-1, keepdims=True) * inv_den
            sd = jnp.sqrt(var)
            inv = 1.0 / (sd + eps)                    # exact divide (torch parity)
            means.append(mu)
            stds.append(sd)
            a_parts.append(jnp.broadcast_to(inv, (inv.shape[0], D)))  # (TN, D)
            c_parts.append((-mu * inv) * csum)                        # (TN, D)
        # Lane-packed stats: one (TN, 2P) store (mean | std).
        stats_ref[...] = jnp.concatenate(means + stds, axis=-1)
        a_b = jnp.concatenate(a_parts, axis=-1)                       # (TN, P*D)
        c_b = jnp.concatenate(c_parts, axis=-1)                       # (TN, P*D)
        emb = (raw * a_b + c_b + bpe_ref[...]) * g
    else:
        emb = (raw + bpe_ref[...]) * g

    emb_ref[...] = emb.astype(emb_ref.dtype)          # ONE lane-dense emb store


def _pick_row_tile(num_rows, per_row_floats):
    """Row tile TN and scoped-VMEM limit, derived per TPU generation."""
    try:
        info = pltpu.get_tpu_info()
        vmem_cap = int(getattr(info, "vmem_capacity_bytes", 0)) or 64 * 1024 * 1024
    except Exception:                                 # unknown backend / interpret
        vmem_cap = 64 * 1024 * 1024
    # <= 3/4 of physical VMEM, hard cap 96 MiB (v5e/v6e -> 96 MiB, v7x -> 48 MiB).
    vmem_limit = min(vmem_cap * 3 // 4, 96 * 1024 * 1024)
    # Double-buffered per-row blocks use <= ~1/3 of the limit, leaving room for
    # the broadcast weights and compiler scratch.
    budget = vmem_limit // 3
    tn = budget // (2 * 4 * max(per_row_floats, 1))
    tn = max(8, min(2048, (int(tn) // 8) * 8))
    # v7x megacore: keep >= 2 grid steps so the "parallel" row axis can be
    # split across both TensorCores.
    if num_rows >= 16:
        tn = min(tn, max(8, _round_up((num_rows + 1) // 2, 8)))
    tn = min(tn, max(8, _round_up(num_rows, 8)))
    return tn, vmem_limit


def lblm_input_processor(x_raw_eeg, subject_ids, params, *, patch_length,
                         patch_stride, mask_ratio, use_rev_in, mask_key,
                         emb_dtype=jnp.float32):
    B, C, T = x_raw_eeg.shape
    L, S = patch_length, patch_stride
    assert T >= L, "num_timepoints < patch_length"
    P = (T - L) // S + 1
    D = params["w"].shape[1]
    N = B * C

    rows = x_raw_eeg.reshape(N, T)                    # raw rows, no unfold in HBM

    # Subject gain lookup (nn.Embedding(num_subjects, 1)), repeat per channel.
    if subject_ids is not None:
        gains = params["subject_gain"][subject_ids]   # (B, 1)
        gains = jnp.repeat(gains, C, axis=0)          # (N, 1) == repeat_interleave
    else:
        gains = jnp.ones((N, 1), jnp.float32)
    gains = gains.astype(jnp.float32)

    w = params["w"].astype(jnp.float32)               # (L, D)
    b = params["b"].reshape(1, D).astype(jnp.float32)
    pe = params["pos_enc"][:P].astype(jnp.float32)    # (P, D)

    # Toeplitz-unfolded embedding weight: U[p*S + l, p*D + d] = w[l, d], so one
    # dot x(TN,T) @ U(T,P*D) computes every patch embedding at once.
    row_idx = (jnp.arange(P) * S)[:, None] + jnp.arange(L)[None, :]   # (P, L)
    U = jnp.zeros((T, P, D), jnp.float32)
    U = U.at[row_idx, jnp.arange(P)[:, None], :].set(
        jnp.broadcast_to(w[None, :, :], (P, L, D)))
    U = U.reshape(T, P * D)

    bpe = (pe + b).reshape(1, P * D)                  # hoisted bias + pos-enc
    csum = jnp.sum(w, axis=0, keepdims=True)          # (1, D), RevIN fold-in

    # Row tiling: TN rows per grid step, pad N up to a multiple of TN.
    # Padded rows are all-zero with gain 1: std==0 -> inv==1/eps (finite) and
    # raw==0, so the (discarded) padded outputs stay finite — no NaN/Inf leak.
    per_row_floats = T + 1 + P * D + P * L + (2 * P if use_rev_in else 0)
    TN, vmem_limit = _pick_row_tile(N, per_row_floats)
    N_pad = _round_up(N, TN)
    if N_pad != N:
        rows = jnp.pad(rows, ((0, N_pad - N), (0, 0)))
        gains = jnp.pad(gains, ((0, N_pad - N), (0, 0)), constant_values=1.0)

    kernel = functools.partial(
        _lblm_kernel, patch_length=L, patch_stride=S, num_patches=P,
        embed_dim=D, eps=1e-5, use_rev_in=use_rev_in)

    out_shapes = [
        jax.ShapeDtypeStruct((N_pad, P * D), emb_dtype),        # emb (lane-dense)
        jax.ShapeDtypeStruct((N_pad, P * L), x_raw_eeg.dtype),  # original patches
    ]
    out_specs = [
        pl.BlockSpec((TN, P * D), lambda i: (i, 0)),
        pl.BlockSpec((TN, P * L), lambda i: (i, 0)),
    ]
    if use_rev_in:
        out_shapes.append(jax.ShapeDtypeStruct((N_pad, 2 * P), jnp.float32))
        out_specs.append(pl.BlockSpec((TN, 2 * P), lambda i: (i, 0)))

    in_specs = [
        pl.BlockSpec((TN, T), lambda i: (i, 0)),      # raw EEG rows
        pl.BlockSpec((T, P * D), lambda i: (0, 0)),   # Toeplitz weight U
        pl.BlockSpec((1, P * D), lambda i: (0, 0)),   # bias + positional enc
        pl.BlockSpec((1, D), lambda i: (0, 0)),       # colsum(W)
        pl.BlockSpec((TN, 1), lambda i: (i, 0)),      # subject gains
    ]

    outs = pl.pallas_call(
        kernel,
        out_shape=tuple(out_shapes),
        grid=(N_pad // TN,),
        in_specs=in_specs,
        out_specs=tuple(out_specs),
        compiler_params=pltpu.CompilerParams(
            dimension_semantics=("parallel",),
            vmem_limit_bytes=vmem_limit),
    )(rows, U, bpe, csum, gains)

    emb = outs[0][:N].reshape(N, P, D)
    original_patches_for_target = outs[1][:N].reshape(B, C, P, L)

    if use_rev_in:
        stats = outs[2][:N]                           # (N, 2P) = mean | std
        rev_in_mean = stats[:, :P].reshape(B, C, P, 1)
        rev_in_std = stats[:, P:].reshape(B, C, P, 1)
    else:
        rev_in_mean, rev_in_std = None, None

    # Random token mask.
    # TODO(synk): PyTorch's torch.rand RNG stream cannot be reproduced in JAX;
    # we use jax.random.uniform for the Bernoulli mask instead.
    token_mask_prob = jax.random.uniform(mask_key, (N, P))
    masked_indices_bool = token_mask_prob < mask_ratio

    return (emb, original_patches_for_target, masked_indices_bool,
            rev_in_mean, rev_in_std)


def make_params(key, *, patch_length, patch_stride, embed_dim, num_subjects):
    """Deterministic parameter init mirroring the module's __init__."""
    kw, kb = jax.random.split(key)
    bound = 1.0 / math.sqrt(patch_length)
    # stored transposed relative to torch (L, D) so the kernel does x @ w
    w = jax.random.uniform(kw, (patch_length, embed_dim), jnp.float32,
                           minval=-bound, maxval=bound)
    b = jax.random.uniform(kb, (embed_dim,), jnp.float32,
                           minval=-bound, maxval=bound)

    max_patches = (500 - patch_length) // patch_stride + 200
    if max_patches <= 0:
        max_patches = 300
    position = jnp.arange(max_patches, dtype=jnp.float32)[:, None]       # (M, 1)
    div_term = jnp.exp(jnp.arange(0, embed_dim, 2, dtype=jnp.float32)
                       * (-math.log(10000.0) / embed_dim))               # (D/2,)
    pe = jnp.zeros((max_patches, embed_dim), jnp.float32)
    pe = pe.at[:, 0::2].set(jnp.sin(position * div_term))
    if embed_dim > 1:
        pe = pe.at[:, 1::2].set(jnp.cos(position * div_term))

    subject_gain = jnp.ones((num_subjects, 1), jnp.float32)  # nn.init.ones_

    return {"w": w, "b": b, "pos_enc": pe, "subject_gain": subject_gain}


def _reference(x_raw_eeg, subject_ids, params, *, patch_length, patch_stride,
               eps=1e-5):
    """Plain-JAX reference of the deterministic forward math."""
    B, C, T = x_raw_eeg.shape
    P = (T - patch_length) // patch_stride + 1
    N = B * C
    starts = jnp.arange(P) * patch_stride
    idx = starts[:, None] + jnp.arange(patch_length)[None, :]
    patches = x_raw_eeg[:, :, idx]                               # (B, C, P, L)
    pf = patches.reshape(N, P, patch_length).astype(jnp.float32)
    mean = jnp.mean(pf, axis=-1, keepdims=True)
    var = jnp.sum((pf - mean) ** 2, axis=-1, keepdims=True) / (patch_length - 1)
    std = jnp.sqrt(var)
    xn = (pf - mean) / (std + eps)
    emb = jnp.einsum("npl,ld->npd", xn, params["w"]) + params["b"]
    emb = emb + params["pos_enc"][:P][None]
    gains = jnp.repeat(params["subject_gain"][subject_ids], C, axis=0)
    emb = emb * gains[:, :, None]
    return emb, patches, mean, std


if __name__ == "__main__":
    patch_length = 16
    patch_stride = 8
    embed_dim = 32
    num_subjects = 4
    mask_ratio = 0.1

    B, C, T = 2, 4, 64   # -> P = (64-16)//8 + 1 = 7 patches per channel

    key = jax.random.PRNGKey(0)
    k_x, k_p, k_mask = jax.random.split(key, 3)

    x_raw_eeg = jax.random.normal(k_x, (B, C, T), jnp.float32)
    subject_ids = jnp.array([0, 1], dtype=jnp.int32)
    params = make_params(k_p, patch_length=patch_length,
                         patch_stride=patch_stride, embed_dim=embed_dim,
                         num_subjects=num_subjects)

    outs = lblm_input_processor(
        x_raw_eeg, subject_ids, params,
        patch_length=patch_length, patch_stride=patch_stride,
        mask_ratio=mask_ratio, use_rev_in=True, mask_key=k_mask)
    emb, orig_patches, mask, rev_mean, rev_std = jax.block_until_ready(outs)

    P = (T - patch_length) // patch_stride + 1
    N = B * C
    emb_ref, patches_ref, mean_ref, std_ref = _reference(
        x_raw_eeg, subject_ids, params,
        patch_length=patch_length, patch_stride=patch_stride)

    assert emb.shape == (N, P, embed_dim)
    assert orig_patches.shape == (B, C, P, patch_length)
    assert mask.shape == (N, P) and mask.dtype == jnp.bool_
    assert rev_mean.shape == (B, C, P, 1) and rev_std.shape == (B, C, P, 1)
    # emb tolerance covers the different matmul association (Toeplitz fold-in
    # vs normalize-then-matmul) and MXU precision vs the XLA einsum reference.
    assert jnp.allclose(emb, emb_ref, atol=1e-2, rtol=1e-2)
    assert jnp.allclose(orig_patches, patches_ref, atol=0.0)
    assert jnp.allclose(rev_mean.reshape(N, P, 1), mean_ref, atol=1e-5)
    assert jnp.allclose(rev_std.reshape(N, P, 1), std_ref, atol=1e-5)

    print("KERNEL_OK")
</pallas_src>

<mosaic_0001>
module attributes {stable_mosaic.version = 11 : i64} {
  func.func @_lblm_kernel(%arg0: i32, %arg1: memref<8x64xf32, #tpu.memory_space<vmem>>, %arg2: memref<64x224xf32, #tpu.memory_space<vmem>>, %arg3: memref<1x224xf32, #tpu.memory_space<vmem>>, %arg4: memref<1x32xf32, #tpu.memory_space<vmem>>, %arg5: memref<8x1xf32, #tpu.memory_space<vmem>>, %arg6: memref<8x224xf32, #tpu.memory_space<vmem>>, %arg7: memref<8x112xf32, #tpu.memory_space<vmem>>, %arg8: memref<8x14xf32, #tpu.memory_space<vmem>>) attributes {dimension_semantics = [#tpu.dimension_semantics<parallel>], iteration_bounds = array<i64: 1>, scalar_prefetch = 0 : i64, scratch_operands = 0 : i64, tpu.core_type = #tpu.core_type<tc>, window_params = [{transform_indices = @transform_0, window_bounds = array<i64: 8, 64>}, {pipeline_mode = #tpu.pipeline_mode<synchronous>, transform_indices = @transform_1, window_bounds = array<i64: 64, 224>}, {pipeline_mode = #tpu.pipeline_mode<synchronous>, transform_indices = @transform_2, window_bounds = array<i64: 1, 224>}, {pipeline_mode = #tpu.pipeline_mode<synchronous>, transform_indices = @transform_3, window_bounds = array<i64: 1, 32>}, {transform_indices = @transform_4, window_bounds = array<i64: 8, 1>}, {transform_indices = @transform_5, window_bounds = array<i64: 8, 224>}, {transform_indices = @transform_6, window_bounds = array<i64: 8, 112>}, {transform_indices = @transform_7, window_bounds = array<i64: 8, 14>}]} {
    %c0 = arith.constant 0 : index
    %c0_0 = arith.constant 0 : index
    %0 = vector.load %arg1[%c0, %c0_0] : memref<8x64xf32, #tpu.memory_space<vmem>>, vector<8x64xf32>
    %c0_1 = arith.constant 0 : index
    %c0_2 = arith.constant 0 : index
    %1 = vector.load %arg5[%c0_1, %c0_2] : memref<8x1xf32, #tpu.memory_space<vmem>>, vector<8x1xf32>
    %2 = vector.extract_strided_slice %0 {offsets = [0, 0], sizes = [8, 16], strides = [1, 1]} : vector<8x64xf32> to vector<8x16xf32>
    %3 = vector.extract_strided_slice %0 {offsets = [0, 8], sizes = [8, 16], strides = [1, 1]} : vector<8x64xf32> to vector<8x16xf32>
    %4 = vector.extract_strided_slice %0 {offsets = [0, 16], sizes = [8, 16], strides = [1, 1]} : vector<8x64xf32> to vector<8x16xf32>
    %5 = vector.extract_strided_slice %0 {offsets = [0, 24], sizes = [8, 16], strides = [1, 1]} : vector<8x64xf32> to vector<8x16xf32>
    %6 = vector.extract_strided_slice %0 {offsets = [0, 32], sizes = [8, 16], strides = [1, 1]} : vector<8x64xf32> to vector<8x16xf32>
    %7 = vector.extract_strided_slice %0 {offsets = [0, 40], sizes = [8, 16], strides = [1, 1]} : vector<8x64xf32> to vector<8x16xf32>
    %8 = vector.extract_strided_slice %0 {offsets = [0, 48], sizes = [8, 16], strides = [1, 1]} : vector<8x64xf32> to vector<8x16xf32>
    %9 = tpu.concatenate %2, %3, %4, %5, %6, %7, %8 in 1 : vector<8x16xf32>, vector<8x16xf32>, vector<8x16xf32>, vector<8x16xf32>, vector<8x16xf32>, vector<8x16xf32>, vector<8x16xf32> -> vector<8x112xf32>
    %c0_3 = arith.constant 0 : index
    %c0_4 = arith.constant 0 : index
    %10 = vector.load %arg7[%c0_3, %c0_4] : memref<8x112xf32, #tpu.memory_space<vmem>>, vector<8x112xf32>
    tpu.vector_store %arg7[%c0_3, %c0_4], %9 {strides = array<i32>} : memref<8x112xf32, #tpu.memory_space<vmem>>, vector<8x112xf32>,
    %c0_5 = arith.constant 0 : index
    %c0_6 = arith.constant 0 : index
    %11 = vector.load %arg2[%c0_5, %c0_6] : memref<64x224xf32, #tpu.memory_space<vmem>>, vector<64x224xf32>
    %cst = arith.constant dense<0.000000e+00> : vector<8x224xf32>
    %12 = tpu.matmul %0, %11, %cst {dimension_numbers = #tpu.dot_dimension_numbers<[1], [0], [0], [1], [0, 0, 1, 1], [], []>} : vector<8x64xf32>, vector<64x224xf32>, vector<8x224xf32> -> vector<8x224xf32>
    %c0_7 = arith.constant 0 : index
    %c0_8 = arith.constant 0 : index
    %13 = vector.load %arg4[%c0_7, %c0_8] : memref<1x32xf32, #tpu.memory_space<vmem>>, vector<1x32xf32>
    %cst_9 = arith.constant dense<0.000000e+00> : vector<8xf32>
    %14 = vector.multi_reduction <add>, %2, %cst_9 [1] : vector<8x16xf32> to vector<8xf32>
    %15 = vector.shape_cast %14 : vector<8xf32> to vector<8x1xf32>
    %cst_10 = arith.constant 1.600000e+01 : f32
    %16 = vector.broadcast %cst_10 : f32 to vector<8x1xf32>
    %17 = arith.divf %15, %16 : vector<8x1xf32>
    %18 = vector.broadcast %17 : vector<8x1xf32> to vector<8x16xf32>
    %19 = arith.subf %2, %18 : vector<8x16xf32>
    %20 = arith.mulf %19, %19 : vector<8x16xf32>
    %cst_11 = arith.constant dense<0.000000e+00> : vector<8xf32>
    %21 = vector.multi_reduction <add>, %20, %cst_11 [1] : vector<8x16xf32> to vector<8xf32>
    %22 = vector.shape_cast %21 : vector<8xf32> to vector<8x1xf32>
    %cst_12 = arith.constant 0.0666666701 : f32
    %23 = vector.broadcast %cst_12 : f32 to vector<8x1xf32>
    %24 = arith.mulf %22, %23 : vector<8x1xf32>
    %25 = math.sqrt %24 : vector<8x1xf32>
    %cst_13 = arith.constant 9.99999974E-6 : f32
    %26 = vector.broadcast %cst_13 : f32 to vector<8x1xf32>
    %27 = arith.addf %25, %26 : vector<8x1xf32>
    %cst_14 = arith.constant 1.000000e+00 : f32
    %28 = vector.broadcast %cst_14 : f32 to vector<8x1xf32>
    %29 = arith.divf %28, %27 : vector<8x1xf32>
    %30 = vector.shape_cast %29 : vector<8x1xf32> to vector<8x1xf32>
    %31 = vector.broadcast %30 : vector<8x1xf32> to vector<8x32xf32>
    %cst_15 = arith.constant 0.000000e+00 : f32
    %32 = vector.broadcast %cst_15 : f32 to vector<8x1xf32>
    %33 = arith.subf %32, %17 : vector<8x1xf32>
    %34 = arith.mulf %33, %29 : vector<8x1xf32>
    %35 = vector.broadcast %34 : vector<8x1xf32> to vector<8x32xf32>
    %36 = vector.broadcast %13 : vector<1x32xf32> to vector<8x32xf32>
    %37 = arith.mulf %35, %36 : vector<8x32xf32>
    %cst_16 = arith.constant dense<0.000000e+00> : vector<8xf32>
    %38 = vector.multi_reduction <add>, %3, %cst_16 [1] : vector<8x16xf32> to vector<8xf32>
    %39 = vector.shape_cast %38 : vector<8xf32> to vector<8x1xf32>
    %cst_17 = arith.constant 1.600000e+01 : f32
    %40 = vector.broadcast %cst_17 : f32 to vector<8x1xf32>
    %41 = arith.divf %39, %40 : vector<8x1xf32>
    %42 = vector.broadcast %41 : vector<8x1xf32> to vector<8x16xf32>
    %43 = arith.subf %3, %42 : vector<8x16xf32>
    %44 = arith.mulf %43, %43 : vector<8x16xf32>
    %cst_18 = arith.constant dense<0.000000e+00> : vector<8xf32>
    %45 = vector.multi_reduction <add>, %44, %cst_18 [1] : vector<8x16xf32> to vector<8xf32>
    %46 = vector.shape_cast %45 : vector<8xf32> to vector<8x1xf32>
    %cst_19 = arith.constant 0.0666666701 : f32
    %47 = vector.broadcast %cst_19 : f32 to vector<8x1xf32>
    %48 = arith.mulf %46, %47 : vector<8x1xf32>
    %49 = math.sqrt %48 : vector<8x1xf32>
    %cst_20 = arith.constant 9.99999974E-6 : f32
    %50 = vector.broadcast %cst_20 : f32 to vector<8x1xf32>
    %51 = arith.addf %49, %50 : vector<8x1xf32>
    %cst_21 = arith.constant 1.000000e+00 : f32
    %52 = vector.broadcast %cst_21 : f32 to vector<8x1xf32>
    %53 = arith.divf %52, %51 : vector<8x1xf32>
    %54 = vector.shape_cast %53 : vector<8x1xf32> to vector<8x1xf32>
    %55 = vector.broadcast %54 : vector<8x1xf32> to vector<8x32xf32>
    %cst_22 = arith.constant 0.000000e+00 : f32
    %56 = vector.broadcast %cst_22 : f32 to vector<8x1xf32>
    %57 = arith.subf %56, %41 : vector<8x1xf32>
    %58 = arith.mulf %57, %53 : vector<8x1xf32>
    %59 = vector.broadcast %58 : vector<8x1xf32> to vector<8x32xf32>
    %60 = vector.broadcast %13 : vector<1x32xf32> to vector<8x32xf32>
    %61 = arith.mulf %59, %60 : vector<8x32xf32>
    %cst_23 = arith.constant dense<0.000000e+00> : vector<8xf32>
    %62 = vector.multi_reduction <add>, %4, %cst_23 [1] : vector<8x16xf32> to vector<8xf32>
    %63 = vector.shape_cast %62 : vector<8xf32> to vector<8x1xf32>
    %cst_24 = arith.constant 1.600000e+01 : f32
    %64 = vector.broadcast %cst_24 : f32 to vector<8x1xf32>
    %65 = arith.divf %63, %64 : vector<8x1xf32>
    %66 = vector.broadcast %65 : vector<8x1xf32> to vector<8x16xf32>
    %67 = arith.subf %4, %66 : vector<8x16xf32>
    %68 = arith.mulf %67, %67 : vector<8x16xf32>
    %cst_25 = arith.constant dense<0.000000e+00> : vector<8xf32>
    %69 = vector.multi_reduction <add>, %68, %cst_25 [1] : vector<8x16xf32> to vector<8xf32>
    %70 = vector.shape_cast %69 : vector<8xf32> to vector<8x1xf32>
    %cst_26 = arith.constant 0.0666666701 : f32
    %71 = vector.broadcast %cst_26 : f32 to vector<8x1xf32>
    %72 = arith.mulf %70, %71 : vector<8x1xf32>
    %73 = math.sqrt %72 : vector<8x1xf32>
    %cst_27 = arith.constant 9.99999974E-6 : f32
    %74 = vector.broadcast %cst_27 : f32 to vector<8x1xf32>
    %75 = arith.addf %73, %74 : vector<8x1xf32>
    %cst_28 = arith.constant 1.000000e+00 : f32
    %76 = vector.broadcast %cst_28 : f32 to vector<8x1xf32>
    %77 = arith.divf %76, %75 : vector<8x1xf32>
    %78 = vector.shape_cast %77 : vector<8x1xf32> to vector<8x1xf32>
    %79 = vector.broadcast %78 : vector<8x1xf32> to vector<8x32xf32>
    %cst_29 = arith.constant 0.000000e+00 : f32
    %80 = vector.broadcast %cst_29 : f32 to vector<8x1xf32>
    %81 = arith.subf %80, %65 : vector<8x1xf32>
    %82 = arith.mulf %81, %77 : vector<8x1xf32>
    %83 = vector.broadcast %82 : vector<8x1xf32> to vector<8x32xf32>
    %84 = vector.broadcast %13 : vector<1x32xf32> to vector<8x32xf32>
    %85 = arith.mulf %83, %84 : vector<8x32xf32>
    %cst_30 = arith.constant dense<0.000000e+00> : vector<8xf32>
    %86 = vector.multi_reduction <add>, %5, %cst_30 [1] : vector<8x16xf32> to vector<8xf32>
    %87 = vector.shape_cast %86 : vector<8xf32> to vector<8x1xf32>
    %cst_31 = arith.constant 1.600000e+01 : f32
    %88 = vector.broadcast %cst_31 : f32 to vector<8x1xf32>
    %89 = arith.divf %87, %88 : vector<8x1xf32>
    %90 = vector.broadcast %89 : vector<8x1xf32> to vector<8x16xf32>
    %91 = arith.subf %5, %90 : vector<8x16xf32>
    %92 = arith.mulf %91, %91 : vector<8x16xf32>
    %cst_32 = arith.constant dense<0.000000e+00> : vector<8xf32>
    %93 = vector.multi_reduction <add>, %92, %cst_32 [1] : vector<8x16xf32> to vector<8xf32>
    %94 = vector.shape_cast %93 : vector<8xf32> to vector<8x1xf32>
    %cst_33 = arith.constant 0.0666666701 : f32
    %95 = vector.broadcast %cst_33 : f32 to vector<8x1xf32>
    %96 = arith.mulf %94, %95 : vector<8x1xf32>
    %97 = math.sqrt %96 : vector<8x1xf32>
    %cst_34 = arith.constant 9.99999974E-6 : f32
    %98 = vector.broadcast %cst_34 : f32 to vector<8x1xf32>
    %99 = arith.addf %97, %98 : vector<8x1xf32>
    %cst_35 = arith.constant 1.000000e+00 : f32
    %100 = vector.broadcast %cst_35 : f32 to vector<8x1xf32>
    %101 = arith.divf %100, %99 : vector<8x1xf32>
    %102 = vector.shape_cast %101 : vector<8x1xf32> to vector<8x1xf32>
    %103 = vector.broadcast %102 : vector<8x1xf32> to vector<8x32xf32>
    %cst_36 = arith.constant 0.000000e+00 : f32
    %104 = vector.broadcast %cst_36 : f32 to vector<8x1xf32>
    %105 = arith.subf %104, %89 : vector<8x1xf32>
    %106 = arith.mulf %105, %101 : vector<8x1xf32>
    %107 = vector.broadcast %106 : vector<8x1xf32> to vector<8x32xf32>
    %108 = vector.broadcast %13 : vector<1x32xf32> to vector<8x32xf32>
    %109 = arith.mulf %107, %108 : vector<8x32xf32>
    %cst_37 = arith.constant dense<0.000000e+00> : vector<8xf32>
    %110 = vector.multi_reduction <add>, %6, %cst_37 [1] : vector<8x16xf32> to vector<8xf32>
    %111 = vector.shape_cast %110 : vector<8xf32> to vector<8x1xf32>
    %cst_38 = arith.constant 1.600000e+01 : f32
    %112 = vector.broadcast %cst_38 : f32 to vector<8x1xf32>
    %113 = arith.divf %111, %112 : vector<8x1xf32>
    %114 = vector.broadcast %113 : vector<8x1xf32> to vector<8x16xf32>
    %115 = arith.subf %6, %114 : vector<8x16xf32>
    %116 = arith.mulf %115, %115 : vector<8x16xf32>
    %cst_39 = arith.constant dense<0.000000e+00> : vector<8xf32>
    %117 = vector.multi_reduction <add>, %116, %cst_39 [1] : vector<8x16xf32> to vector<8xf32>
    %118 = vector.shape_cast %117 : vector<8xf32> to vector<8x1xf32>
    %cst_40 = arith.constant 0.0666666701 : f32
    %119 = vector.broadcast %cst_40 : f32 to vector<8x1xf32>
    %120 = arith.mulf %118, %119 : vector<8x1xf32>
    %121 = math.sqrt %120 : vector<8x1xf32>
    %cst_41 = arith.constant 9.99999974E-6 : f32
    %122 = vector.broadcast %cst_41 : f32 to vector<8x1xf32>
    %123 = arith.addf %121, %122 : vector<8x1xf32>
    %cst_42 = arith.constant 1.000000e+00 : f32
    %124 = vector.broadcast %cst_42 : f32 to vector<8x1xf32>
    %125 = arith.divf %124, %123 : vector<8x1xf32>
    %126 = vector.shape_cast %125 : vector<8x1xf32> to vector<8x1xf32>
    %127 = vector.broadcast %126 : vector<8x1xf32> to vector<8x32xf32>
    %cst_43 = arith.constant 0.000000e+00 : f32
    %128 = vector.broadcast %cst_43 : f32 to vector<8x1xf32>
    %129 = arith.subf %128, %113 : vector<8x1xf32>
    %130 = arith.mulf %129, %125 : vector<8x1xf32>
    %131 = vector.broadcast %130 : vector<8x1xf32> to vector<8x32xf32>
    %132 = vector.broadcast %13 : vector<1x32xf32> to vector<8x32xf32>
    %133 = arith.mulf %131, %132 : vector<8x32xf32>
    %cst_44 = arith.constant dense<0.000000e+00> : vector<8xf32>
    %134 = vector.multi_reduction <add>, %7, %cst_44 [1] : vector<8x16xf32> to vector<8xf32>
    %135 = vector.shape_cast %134 : vector<8xf32> to vector<8x1xf32>
    %cst_45 = arith.constant 1.600000e+01 : f32
    %136 = vector.broadcast %cst_45 : f32 to vector<8x1xf32>
    %137 = arith.divf %135, %136 : vector<8x1xf32>
    %138 = vector.broadcast %137 : vector<8x1xf32> to vector<8x16xf32>
    %139 = arith.subf %7, %138 : vector<8x16xf32>
    %140 = arith.mulf %139, %139 : vector<8x16xf32>
    %cst_46 = arith.constant dense<0.000000e+00> : vector<8xf32>
    %141 = vector.multi_reduction <add>, %140, %cst_46 [1] : vector<8x16xf32> to vector<8xf32>
    %142 = vector.shape_cast %141 : vector<8xf32> to vector<8x1xf32>
    %cst_47 = arith.constant 0.0666666701 : f32
    %143 = vector.broadcast %cst_47 : f32 to vector<8x1xf32>
    %144 = arith.mulf %142, %143 : vector<8x1xf32>
    %145 = math.sqrt %144 : vector<8x1xf32>
    %cst_48 = arith.constant 9.99999974E-6 : f32
    %146 = vector.broadcast %cst_48 : f32 to vector<8x1xf32>
    %147 = arith.addf %145, %146 : vector<8x1xf32>
    %cst_49 = arith.constant 1.000000e+00 : f32
    %148 = vector.broadcast %cst_49 : f32 to vector<8x1xf32>
    %149 = arith.divf %148, %147 : vector<8x1xf32>
    %150 = vector.shape_cast %149 : vector<8x1xf32> to vector<8x1xf32>
    %151 = vector.broadcast %150 : vector<8x1xf32> to vector<8x32xf32>
    %cst_50 = arith.constant 0.000000e+00 : f32
    %152 = vector.broadcast %cst_50 : f32 to vector<8x1xf32>
    %153 = arith.subf %152, %137 : vector<8x1xf32>
    %154 = arith.mulf %153, %149 : vector<8x1xf32>
    %155 = vector.broadcast %154 : vector<8x1xf32> to vector<8x32xf32>
    %156 = vector.broadcast %13 : vector<1x32xf32> to vector<8x32xf32>
    %157 = arith.mulf %155, %156 : vector<8x32xf32>
    %cst_51 = arith.constant dense<0.000000e+00> : vector<8xf32>
    %158 = vector.multi_reduction <add>, %8, %cst_51 [1] : vector<8x16xf32> to vector<8xf32>
    %159 = vector.shape_cast %158 : vector<8xf32> to vector<8x1xf32>
    %cst_52 = arith.constant 1.600000e+01 : f32
    %160 = vector.broadcast %cst_52 : f32 to vector<8x1xf32>
    %161 = arith.divf %159, %160 : vector<8x1xf32>
    %162 = vector.broadcast %161 : vector<8x1xf32> to vector<8x16xf32>
    %163 = arith.subf %8, %162 : vector<8x16xf32>
    %164 = arith.mulf %163, %163 : vector<8x16xf32>
    %cst_53 = arith.constant dense<0.000000e+00> : vector<8xf32>
    %165 = vector.multi_reduction <add>, %164, %cst_53 [1] : vector<8x16xf32> to vector<8xf32>
    %166 = vector.shape_cast %165 : vector<8xf32> to vector<8x1xf32>
    %cst_54 = arith.constant 0.0666666701 : f32
    %167 = vector.broadcast %cst_54 : f32 to vector<8x1xf32>
    %168 = arith.mulf %166, %167 : vector<8x1xf32>
    %169 = math.sqrt %168 : vector<8x1xf32>
    %cst_55 = arith.constant 9.99999974E-6 : f32
    %170 = vector.broadcast %cst_55 : f32 to vector<8x1xf32>
    %171 = arith.addf %169, %170 : vector<8x1xf32>
    %cst_56 = arith.constant 1.000000e+00 : f32
    %172 = vector.broadcast %cst_56 : f32 to vector<8x1xf32>
    %173 = arith.divf %172, %171 : vector<8x1xf32>
    %174 = vector.shape_cast %173 : vector<8x1xf32> to vector<8x1xf32>
    %175 = vector.broadcast %174 : vector<8x1xf32> to vector<8x32xf32>
    %cst_57 = arith.constant 0.000000e+00 : f32
    %176 = vector.broadcast %cst_57 : f32 to vector<8x1xf32>
    %177 = arith.subf %176, %161 : vector<8x1xf32>
    %178 = arith.mulf %177, %173 : vector<8x1xf32>
    %179 = vector.broadcast %178 : vector<8x1xf32> to vector<8x32xf32>
    %180 = vector.broadcast %13 : vector<1x32xf32> to vector<8x32xf32>
    %181 = arith.mulf %179, %180 : vector<8x32xf32>
    %182 = tpu.concatenate %17, %41, %65, %89, %113, %137, %161, %25, %49, %73, %97, %121, %145, %169 in 1 : vector<8x1xf32>, vector<8x1xf32>, vector<8x1xf32>, vector<8x1xf32>, vector<8x1xf32>, vector<8x1xf32>, vector<8x1xf32>, vector<8x1xf32>, vector<8x1xf32>, vector<8x1xf32>, vector<8x1xf32>, vector<8x1xf32>, vector<8x1xf32>, vector<8x1xf32> -> vector<8x14xf32>
    %c0_58 = arith.constant 0 : index
    %c0_59 = arith.constant 0 : index
    %183 = vector.load %arg8[%c0_58, %c0_59] : memref<8x14xf32, #tpu.memory_space<vmem>>, vector<8x14xf32>
    tpu.vector_store %arg8[%c0_58, %c0_59], %182 {strides = array<i32>} : memref<8x14xf32, #tpu.memory_space<vmem>>, vector<8x14xf32>,
    %184 = tpu.concatenate %31, %55, %79, %103, %127, %151, %175 in 1 : vector<8x32xf32>, vector<8x32xf32>, vector<8x32xf32>, vector<8x32xf32>, vector<8x32xf32>, vector<8x32xf32>, vector<8x32xf32> -> vector<8x224xf32>
    %185 = tpu.concatenate %37, %61, %85, %109, %133, %157, %181 in 1 : vector<8x32xf32>, vector<8x32xf32>, vector<8x32xf32>, vector<8x32xf32>, vector<8x32xf32>, vector<8x32xf32>, vector<8x32xf32> -> vector<8x224xf32>
    %186 = arith.mulf %12, %184 : vector<8x224xf32>
    %187 = arith.addf %186, %185 : vector<8x224xf32>
    %c0_60 = arith.constant 0 : index
    %c0_61 = arith.constant 0 : index
    %188 = vector.load %arg3[%c0_60, %c0_61] : memref<1x224xf32, #tpu.memory_space<vmem>>, vector<1x224xf32>
    %189 = vector.broadcast %188 : vector<1x224xf32> to vector<8x224xf32>
    %190 = arith.addf %187, %189 : vector<8x224xf32>
    %191 = vector.broadcast %1 : vector<8x1xf32> to vector<8x224xf32>
    %192 = arith.mulf %190, %191 : vector<8x224xf32>
    %c0_62 = arith.constant 0 : index
    %c0_63 = arith.constant 0 : index
    %193 = vector.load %arg6[%c0_62, %c0_63] : memref<8x224xf32, #tpu.memory_space<vmem>>, vector<8x224xf32>
    tpu.vector_store %arg6[%c0_62, %c0_63], %192 {strides = array<i32>} : memref<8x224xf32, #tpu.memory_space<vmem>>, vector<8x224xf32>,
    return
  }
  func.func @transform_0(%arg0: i32) -> (i32, i32) {
    %c0_i32 = arith.constant 0 : i32
    %c0_i32_0 = arith.constant 0 : i32
    return %arg0, %c0_i32 : i32, i32
  }
  func.func @transform_1(%arg0: i32) -> (i32, i32) {
    %c0_i32 = arith.constant 0 : i32
    %c0_i32_0 = arith.constant 0 : i32
    %c0_i32_1 = arith.constant 0 : i32
    return %c0_i32, %c0_i32_0 : i32, i32
  }
  func.func @transform_2(%arg0: i32) -> (i32, i32) {
    %c0_i32 = arith.constant 0 : i32
    %c0_i32_0 = arith.constant 0 : i32
    %c0_i32_1 = arith.constant 0 : i32
    return %c0_i32, %c0_i32_0 : i32, i32
  }
  func.func @transform_3(%arg0: i32) -> (i32, i32) {
    %c0_i32 = arith.constant 0 : i32
    %c0_i32_0 = arith.constant 0 : i32
    %c0_i32_1 = arith.constant 0 : i32
    return %c0_i32, %c0_i32_0 : i32, i32
  }
  func.func @transform_4(%arg0: i32) -> (i32, i32) {
    %c0_i32 = arith.constant 0 : i32
    %c0_i32_0 = arith.constant 0 : i32
    return %arg0, %c0_i32 : i32, i32
  }
  func.func @transform_5(%arg0: i32) -> (i32, i32) {
    %c0_i32 = arith.constant 0 : i32
    %c0_i32_0 = arith.constant 0 : i32
    return %arg0, %c0_i32 : i32, i32
  }
  func.func @transform_6(%arg0: i32) -> (i32, i32) {
    %c0_i32 = arith.constant 0 : i32
    %c0_i32_0 = arith.constant 0 : i32
    return %arg0, %c0_i32 : i32, i32
  }
  func.func @transform_7(%arg0: i32) -> (i32, i32) {
    %c0_i32 = arith.constant 0 : i32
    %c0_i32_0 = arith.constant 0 : i32
    return %arg0, %c0_i32 : i32, i32
  }
}

</mosaic_0001>

<llo_original>
// kernel: tpu_custom_call.1
$region0: #{tpu_custom_call.1}
  #allocation0 [shape = 'u32[]', space=smem, size = 0x4, offset = 0x4, fixed_abs, tag = 'smem constant byte address 0x4 - core index']
  #allocation1 [shape = 'u32[144,128]{1,0:T(1,128)}', space=vmem, size = 0x12000, scoped, tag = 'internal scratch']
  %s0 = inlined_call_operand.vmem [shape: f32[8,64], index: 0, kind: input, shape index: {}]
  %s1 = inlined_call_operand.hbm [shape: f32[64,224], index: 1, kind: input, shape index: {}]
  %s2 = inlined_call_operand.vmem [shape: f32[1,224], index: 2, kind: input, shape index: {}]
  %s3 = inlined_call_operand.vmem [shape: f32[1,32], index: 3, kind: input, shape index: {}]
  %s4 = inlined_call_operand.vmem [shape: f32[8,1], index: 4, kind: input, shape index: {}]
  %s5 = inlined_call_operand.hbm [shape: f32[8,224], index: 5, kind: output, shape index: {0}]
  %s6 = inlined_call_operand.hbm [shape: f32[8,112], index: 6, kind: output, shape index: {1}]
  %s7 = inlined_call_operand.hbm [shape: f32[8,14], index: 7, kind: output, shape index: {2}]
  %8 = xla_tuple %s5, %s6, %s7
  %s9 = sld [smem:[#allocation0]]
  $region50: #{tpu_custom_call.1} parent=0
    _
  %s11 = ssub.s32 1, %s9
  %s12 = scalar_select 0, %s11, %s9
  $region1: #{tpu_custom_call.1} parent=0
    #allocation2 [shape = 'u8[65536]{0}', space=vmem, size = 0x10000, scoped, tag = 'input window, operand 1, single buffered']
    #allocation3 [shape = 's32[1]{0}', space=sflag, size = 0x4, scoped, tag = 'scoped memory for tpu_custom_call.1']
    #allocation4 [shape = 's32[1]{0}', space=sflag, size = 0x4, scoped, tag = 'scoped memory for tpu_custom_call.1']
    #allocation5 [shape = 'u8[8192]{0}', space=vmem, size = 0x2000, scoped, tag = 'output window, operand 0, single buffered']
    #allocation6 [shape = 'u8[4096]{0}', space=vmem, size = 0x1000, scoped, tag = 'output window, operand 1, single buffered']
    #allocation7 [shape = 's32[1]{0}', space=sflag, size = 0x4, scoped, tag = 'scoped memory for tpu_custom_call.1']
    #allocation8 [shape = 'u8[4096]{0}', space=vmem, size = 0x1000, scoped, tag = 'output window, operand 2, single buffered']
    %13 = vsyncpa [#allocation3], 0
    %14 = vsyncpa [#allocation4], 0
    %15 = vsyncpa [#allocation7], 0
    // Predicated region
    $region2: #{tpu_custom_call.1} parent=1 // pred_check
      _
    $region3: #{tpu_custom_call.1} parent=1 // pred_check_branch
      %17 = sbr.rel (0) target = $region5
    $region4: #{tpu_custom_call.1} parent=1 // pred_region
      _
    $region5: #{tpu_custom_call.1} parent=1 // pred_fallthru
      _
    // Predicated region
    $region6: #{tpu_custom_call.1} parent=1 // pred_check
      _
    $region7: #{tpu_custom_call.1} parent=1 // pred_check_branch
      %19 = sbr.rel (0) target = $region9
    $region8: #{tpu_custom_call.1} parent=1 // pred_region
      %s21 = ssub.s32 2048, 2048
      %22 = vsyncadd [#allocation3], %s21
      %s23 = sshll.u32 [#allocation2], 4
      %s24 = int_to_ptr.vmem [resolvable:$true] %s23
      %29 = dma.hbm_to_vmem [thread:$0]  %s1, 2048, %s24, [#allocation3], 256, 256, 16
    $region9: #{tpu_custom_call.1} parent=1 // pred_fallthru
      _
    // Predicated region
    $region10: #{tpu_custom_call.1} parent=1 // pred_check
      _
    $region11: #{tpu_custom_call.1} parent=1 // pred_check_branch
      %31 = sbr.rel (0) target = $region13
    $region12: #{tpu_custom_call.1} parent=1 // pred_region
      _
    $region13: #{tpu_custom_call.1} parent=1 // pred_fallthru
      _
    // Predicated region
    $region14: #{tpu_custom_call.1} parent=1 // pred_check
      _
    $region15: #{tpu_custom_call.1} parent=1 // pred_check_branch
      %33 = sbr.rel (0) target = $region17
    $region16: #{tpu_custom_call.1} parent=1 // pred_region
      _
    $region17: #{tpu_custom_call.1} parent=1 // pred_fallthru
      _
    // Predicated region
    $region18: #{tpu_custom_call.1} parent=1 // pred_check
      _
    $region19: #{tpu_custom_call.1} parent=1 // pred_check_branch
      %35 = sbr.rel (0) target = $region21
    $region20: #{tpu_custom_call.1} parent=1 // pred_region
      _
    $region21: #{tpu_custom_call.1} parent=1 // pred_fallthru
      _
    // Predicated region
    $region22: #{tpu_custom_call.1} parent=1 // pred_check
      _
    $region23: #{tpu_custom_call.1} parent=1 // pred_check_branch
      %37 = sbr.rel (0) target = $region25
    $region24: #{tpu_custom_call.1} parent=1 // pred_region
      %38 = dma.done [#allocation3], 2048
    $region25: #{tpu_custom_call.1} parent=1 // pred_fallthru
      _
    %v39 = vld [vmem:[%s0] sm:$0xff]
    %v40 = vld [vmem:[%s4] sm:$0xff]
    %42 = vrot.lane.b32.xlu0 %v39, 8
    %v43 = vpop.permute.xlu0 %42
    %45 = vrot.lane.b32.xlu0 %v39, 16
    %v46 = vpop.permute.xlu0 %45
    %48 = vrot.lane.b32.xlu0 %v39, 24
    %v49 = vpop.permute.xlu0 %48
    %51 = vrot.lane.b32.xlu0 %v39, 32
    %v52 = vpop.permute.xlu0 %51
    %54 = vrot.lane.b32.xlu0 %v39, 40
    %v55 = vpop.permute.xlu0 %54
    %57 = vrot.lane.b32.xlu0 %v39, 48
    %v58 = vpop.permute.xlu0 %57
    %vm60 = vcmask 130048
    %v61 = vsel %vm60, %v39, %v43
    %vm62 = vcmask 261120
    %v63 = vsel %vm62, %v61, %v46
    %vm64 = vcmask 392192
    %v65 = vsel %vm64, %v63, %v49
    %vm66 = vcmask 523264
    %v67 = vsel %vm66, %v65, %v52
    %vm68 = vcmask 654336
    %v69 = vsel %vm68, %v67, %v55
    %vm70 = vcmask 785408
    %v71 = vsel %vm70, %v69, %v58
    %vm72 = vcmask 916480
    %73 = vst.msk [vmem:[#allocation6] sm:$0xff] %vm72, %v71
    %v74 = vld [vmem:[#allocation2] sm:$0xff]
    %v75 = vld [vmem:[#allocation2 + $0x8] sm:$0xff]
    %v76 = vld [vmem:[#allocation2 + $0x10] sm:$0xff]
    %v77 = vld [vmem:[#allocation2 + $0x18] sm:$0xff]
    %v78 = vld [vmem:[#allocation2 + $0x20] sm:$0xff]
    %v79 = vld [vmem:[#allocation2 + $0x28] sm:$0xff]
    %v80 = vld [vmem:[#allocation2 + $0x30] sm:$0xff]
    %v81 = vld [vmem:[#allocation2 + $0x38] sm:$0xff]
    %v82 = vld [vmem:[#allocation2 + $0x40] sm:$0xff]
    %v83 = vld [vmem:[#allocation2 + $0x48] sm:$0xff]
    %v84 = vld [vmem:[#allocation2 + $0x50] sm:$0xff]
    %v85 = vld [vmem:[#allocation2 + $0x58] sm:$0xff]
    %v86 = vld [vmem:[#allocation2 + $0x60] sm:$0xff]
    %v87 = vld [vmem:[#allocation2 + $0x68] sm:$0xff]
    %v88 = vld [vmem:[#allocation2 + $0x70] sm:$0xff]
    %v89 = vld [vmem:[#allocation2 + $0x78] sm:$0xff]
    %v90 = vsel %vm66, %v39, 0
    %92 = vmatprep.subr.mxu0 %v75
    %93 = vmatpush1.msra.mxu0 %v74
    %94 = vmatprep.subr.mxu0 %v77
    %95 = vmatpush1.msra.mxu0 %v76
    %96 = vmatprep.subr.mxu0 %v79
    %97 = vmatpush1.msra.mxu0 %v78
    %98 = vmatprep.subr.mxu0 %v81
    %99 = vmatpush1.msra.mxu0 %v80
    %100 = vmatprep.subr.mxu0 %v83
    %101 = vmatpush1.msra.mxu0 %v82
    %102 = vmatprep.subr.mxu0 %v85
    %103 = vmatpush1.msra.mxu0 %v84
    %104 = vmatprep.subr.mxu0 %v87
    %105 = vmatpush1.msra.mxu0 %v86
    %106 = vmatprep.subr.mxu0 %v89
    %107 = vmatpush1.msra.mxu0 %v88
    %108 = vmatprep.subr.mxu0 0.0
    %109 = vmatpush1.msra.mxu0 0.0
    %110 = vmatprep.subr.mxu0 0.0
    %111 = vmatpush1.msra.mxu0 0.0
    %112 = vmatprep.subr.mxu0 0.0
    %113 = vmatpush1.msra.mxu0 0.0
    %114 = vmatprep.subr.mxu0 0.0
    %115 = vmatpush1.msra.mxu0 0.0
    %116 = vmatprep.subr.mxu0 0.0
    %117 = vmatpush1.msra.mxu0 0.0
    %118 = vmatprep.subr.mxu0 0.0
    %119 = vmatpush1.msra.mxu0 0.0
    %120 = vmatprep.subr.mxu0 0.0
    %121 = vmatpush1.msra.mxu0 0.0
    %122 = vmatprep.subr.mxu0 0.0
    %123 = vmatpush1.msra.mxu0 0.0
    %124 = vmatprep.subr.mxu0 0.0
    %125 = vmatpush1.msra.mxu0 0.0
    %126 = vmatprep.subr.mxu0 0.0
    %127 = vmatpush1.msra.mxu0 0.0
    %128 = vmatprep.subr.mxu0 0.0
    %129 = vmatpush1.msra.mxu0 0.0
    %130 = vmatprep.subr.mxu0 0.0
    %131 = vmatpush1.msra.mxu0 0.0
    %132 = vmatprep.subr.mxu0 0.0
    %133 = vmatpush1.msra.mxu0 0.0
    %134 = vmatprep.subr.mxu0 0.0
    %135 = vmatpush1.msra.mxu0 0.0
    %136 = vmatprep.subr.mxu0 0.0
    %137 = vmatpush1.msra.mxu0 0.0
    %138 = vmatprep.subr.mxu0 0.0
    %139 = vmatpush1.msra.mxu0 0.0
    %140 = vmatprep.subr.mxu0 0.0
    %141 = vmatpush1.msra.mxu0 0.0
    %142 = vmatprep.subr.mxu0 0.0
    %143 = vmatpush1.msra.mxu0 0.0
    %144 = vmatprep.subr.mxu0 0.0
    %145 = vmatpush1.msra.mxu0 0.0
    %146 = vmatprep.subr.mxu0 0.0
    %147 = vmatpush1.msra.mxu0 0.0
    %148 = vmatprep.subr.mxu0 0.0
    %149 = vmatpush1.msra.mxu0 0.0
    %150 = vmatprep.subr.mxu0 0.0
    %151 = vmatpush1.msra.mxu0 0.0
    %152 = vmatprep.subr.mxu0 0.0
    %153 = vmatpush1.msra.mxu0 0.0
    %154 = vmatprep.subr.mxu0 0.0
    %155 = vmatpush1.msra.mxu0 0.0
    %156 = vmatprep.mubr.f32.mxu0 0.0
    %157 = vmatmul.mubr.f32.gmra.mrb[0].mxu0 %v90
    %v158 = vpop.f32.mrb[0].mxu0
    %v159 = vadd.f32 0.0, %v158
    %v160 = vpop.f32.mrb[0].mxu0
    %v161 = vadd.f32 0.0, %v160
    %162 = vdwg.mxu0
    %v163 = vld [vmem:[%s3] sm:$0x1]
    %v164 = vsel %vm60, %v39, 0.0
    %165 = vadd.xlane.f32.xlu0 %v164
    %v166 = vpop.xlane.xlu0 %165
    %v167 = vrcp.pop 16.0
    %v168 = vmul.f32 %v166, %v167
    %v169 = vsub.f32 %v39, %v168
    %v170 = vmul.f32 %v169, %v169
    %v171 = vsel %vm60, %v170, 0.0
    %172 = vadd.xlane.f32.xlu0 %v171
    %v173 = vpop.xlane.xlu0 %172
    %v174 = vmul.f32 %v173, 0.06666667
    %v175 = vrsqrt.pop %v174
    %v176 = vmul.f32 %v174, %v175
    %vm177 = vcmp.eq.f32.partialorder %v174, inf
    %v178 = vsel %vm177, %v174, %v176
    %vm179 = vcmp.eq.f32.partialorder %v174, 0.0
    %v180 = vand.u32 %v174, 2147483648
    %v181 = vsel %vm179, %v180, %v178
    %v182 = vadd.f32 %v181, 1e-05
    %v183 = vrcp.pop %v182
    %v184 = vmul.f32 1.0, %v183
    %v185 = vsub.f32 0.0, %v168
    %v186 = vmul.f32 %v185, %v184
    %v188 = vlaneseq
    %v189 = vshrl.u32 %v188, 7
    %v190 = vsub.s32 0, %v189
    %v191 = vrot.slane %v163, %v190
    %v193 = vmul.f32 %v186, %v191
    %194 = vrot.lane.b32.xlu0 %v39, 120
    %v195 = vpop.permute.xlu0 %194
    %v197 = vsel %vm60, %v195, 0.0
    %198 = vadd.xlane.f32.xlu0 %v197
    %v199 = vpop.xlane.xlu0 %198
    %v200 = vmul.f32 %v199, %v167
    %v201 = vsub.f32 %v39, %v200
    %v202 = vmul.f32 %v201, %v201
    %204 = vrot.lane.b32.xlu0 %v202, 120
    %v205 = vpop.permute.xlu0 %204
    %v207 = vsel %vm60, %v205, 0.0
    %208 = vadd.xlane.f32.xlu0 %v207
    %v209 = vpop.xlane.xlu0 %208
    %v210 = vmul.f32 %v209, 0.06666667
    %v211 = vrsqrt.pop %v210
    %v212 = vmul.f32 %v210, %v211
    %vm213 = vcmp.eq.f32.partialorder %v210, inf
    %v214 = vsel %vm213, %v210, %v212
    %vm215 = vcmp.eq.f32.partialorder %v210, 0.0
    %v216 = vand.u32 %v210, 2147483648
    %v217 = vsel %vm215, %v216, %v214
    %v218 = vadd.f32 %v217, 1e-05
    %v219 = vrcp.pop %v218
    %v220 = vmul.f32 1.0, %v219
    %v221 = vsub.f32 0.0, %v200
    %v222 = vmul.f32 %v221, %v220
    %v223 = vmul.f32 %v222, %v191
    %224 = vrot.lane.b32.xlu0 %v39, 112
    %v225 = vpop.permute.xlu0 %224
    %v227 = vsel %vm60, %v225, 0.0
    %228 = vadd.xlane.f32.xlu0 %v227
    %v229 = vpop.xlane.xlu0 %228
    %v230 = vmul.f32 %v229, %v167
    %v231 = vsub.f32 %v39, %v230
    %v232 = vmul.f32 %v231, %v231
    %234 = vrot.lane.b32.xlu0 %v232, 112
    %v235 = vpop.permute.xlu0 %234
    %v237 = vsel %vm60, %v235, 0.0
    %238 = vadd.xlane.f32.xlu0 %v237
    %v239 = vpop.xlane.xlu0 %238
    %v240 = vmul.f32 %v239, 0.06666667
    %v241 = vrsqrt.pop %v240
    %v242 = vmul.f32 %v240, %v241
    %vm243 = vcmp.eq.f32.partialorder %v240, inf
    %v244 = vsel %vm243, %v240, %v242
    %vm245 = vcmp.eq.f32.partialorder %v240, 0.0
    %v246 = vand.u32 %v240, 2147483648
    %v247 = vsel %vm245, %v246, %v244
    %v248 = vadd.f32 %v247, 1e-05
    %v249 = vrcp.pop %v248
    %v250 = vmul.f32 1.0, %v249
    %v251 = vsub.f32 0.0, %v230
    %v252 = vmul.f32 %v251, %v250
    %v253 = vmul.f32 %v252, %v191
    %254 = vrot.lane.b32.xlu0 %v39, 104
    %v255 = vpop.permute.xlu0 %254
    %v257 = vsel %vm60, %v255, 0.0
    %258 = vadd.xlane.f32.xlu0 %v257
    %v259 = vpop.xlane.xlu0 %258
    %v260 = vmul.f32 %v259, %v167
    %v261 = vsub.f32 %v39, %v260
    %v262 = vmul.f32 %v261, %v261
    %264 = vrot.lane.b32.xlu0 %v262, 104
    %v265 = vpop.permute.xlu0 %264
    %v267 = vsel %vm60, %v265, 0.0
    %268 = vadd.xlane.f32.xlu0 %v267
    %v269 = vpop.xlane.xlu0 %268
    %v270 = vmul.f32 %v269, 0.06666667
    %v271 = vrsqrt.pop %v270
    %v272 = vmul.f32 %v270, %v271
    %vm273 = vcmp.eq.f32.partialorder %v270, inf
    %v274 = vsel %vm273, %v270, %v272
    %vm275 = vcmp.eq.f32.partialorder %v270, 0.0
    %v276 = vand.u32 %v270, 2147483648
    %v277 = vsel %vm275, %v276, %v274
    %v278 = vadd.f32 %v277, 1e-05
    %v279 = vrcp.pop %v278
    %v280 = vmul.f32 1.0, %v279
    %v281 = vsub.f32 0.0, %v260
    %v282 = vmul.f32 %v281, %v280
    %v283 = vmul.f32 %v282, %v191
    %284 = vrot.lane.b32.xlu0 %v39, 96
    %v285 = vpop.permute.xlu0 %284
    %v287 = vsel %vm60, %v285, 0.0
    %288 = vadd.xlane.f32.xlu0 %v287
    %v289 = vpop.xlane.xlu0 %288
    %v290 = vmul.f32 %v289, %v167
    %v291 = vsub.f32 %v39, %v290
    %v292 = vmul.f32 %v291, %v291
    %294 = vrot.lane.b32.xlu0 %v292, 96
    %v295 = vpop.permute.xlu0 %294
    %v297 = vsel %vm60, %v295, 0.0
    %298 = vadd.xlane.f32.xlu0 %v297
    %v299 = vpop.xlane.xlu0 %298
    %v300 = vmul.f32 %v299, 0.06666667
    %v301 = vrsqrt.pop %v300
    %v302 = vmul.f32 %v300, %v301
    %vm303 = vcmp.eq.f32.partialorder %v300, inf
    %v304 = vsel %vm303, %v300, %v302
    %vm305 = vcmp.eq.f32.partialorder %v300, 0.0
    %v306 = vand.u32 %v300, 2147483648
    %v307 = vsel %vm305, %v306, %v304
    %v308 = vadd.f32 %v307, 1e-05
    %v309 = vrcp.pop %v308
    %v310 = vmul.f32 1.0, %v309
    %v311 = vsub.f32 0.0, %v290
    %v312 = vmul.f32 %v311, %v310
    %v313 = vmul.f32 %v312, %v191
    %314 = vrot.lane.b32.xlu0 %v39, 88
    %v315 = vpop.permute.xlu0 %314
    %v317 = vsel %vm60, %v315, 0.0
    %318 = vadd.xlane.f32.xlu0 %v317
    %v319 = vpop.xlane.xlu0 %318
    %v320 = vmul.f32 %v319, %v167
    %v321 = vsub.f32 %v39, %v320
    %v322 = vmul.f32 %v321, %v321
    %324 = vrot.lane.b32.xlu0 %v322, 88
    %v325 = vpop.permute.xlu0 %324
    %v327 = vsel %vm60, %v325, 0.0
    %328 = vadd.xlane.f32.xlu0 %v327
    %v329 = vpop.xlane.xlu0 %328
    %v330 = vmul.f32 %v329, 0.06666667
    %v331 = vrsqrt.pop %v330
    %v332 = vmul.f32 %v330, %v331
    %vm333 = vcmp.eq.f32.partialorder %v330, inf
    %v334 = vsel %vm333, %v330, %v332
    %vm335 = vcmp.eq.f32.partialorder %v330, 0.0
    %v336 = vand.u32 %v330, 2147483648
    %v337 = vsel %vm335, %v336, %v334
    %v338 = vadd.f32 %v337, 1e-05
    %v339 = vrcp.pop %v338
    %v340 = vmul.f32 1.0, %v339
    %v341 = vsub.f32 0.0, %v320
    %v342 = vmul.f32 %v341, %v340
    %v343 = vmul.f32 %v342, %v191
    %344 = vrot.lane.b32.xlu0 %v39, 80
    %v345 = vpop.permute.xlu0 %344
    %v347 = vsel %vm60, %v345, 0.0
    %348 = vadd.xlane.f32.xlu0 %v347
    %v349 = vpop.xlane.xlu0 %348
    %v350 = vmul.f32 %v349, %v167
    %v351 = vsub.f32 %v39, %v350
    %v352 = vmul.f32 %v351, %v351
    %354 = vrot.lane.b32.xlu0 %v352, 80
    %v355 = vpop.permute.xlu0 %354
    %v357 = vsel %vm60, %v355, 0.0
    %358 = vadd.xlane.f32.xlu0 %v357
    %v359 = vpop.xlane.xlu0 %358
    %v360 = vmul.f32 %v359, 0.06666667
    %v361 = vrsqrt.pop %v360
    %v362 = vmul.f32 %v360, %v361
    %vm363 = vcmp.eq.f32.partialorder %v360, inf
    %v364 = vsel %vm363, %v360, %v362
    %vm365 = vcmp.eq.f32.partialorder %v360, 0.0
    %v366 = vand.u32 %v360, 2147483648
    %v367 = vsel %vm365, %v366, %v364
    %v368 = vadd.f32 %v367, 1e-05
    %v369 = vrcp.pop %v368
    %v370 = vmul.f32 1.0, %v369
    %v371 = vsub.f32 0.0, %v350
    %v372 = vmul.f32 %v371, %v370
    %v373 = vmul.f32 %v372, %v191
    %vm374 = vcmask 7168
    %v375 = vsel %vm374, %v168, %v200
    %vm376 = vcmask 15360
    %v377 = vsel %vm376, %v375, %v230
    %vm378 = vcmask 23552
    %v379 = vsel %vm378, %v377, %v260
    %vm380 = vcmask 31744
    %v381 = vsel %vm380, %v379, %v290
    %vm382 = vcmask 39936
    %v383 = vsel %vm382, %v381, %v320
    %vm384 = vcmask 48128
    %v385 = vsel %vm384, %v383, %v350
    %vm386 = vcmask 56320
    %v387 = vsel %vm386, %v385, %v181
    %vm388 = vcmask 64512
    %v389 = vsel %vm388, %v387, %v217
    %vm390 = vcmask 72704
    %v391 = vsel %vm390, %v389, %v247
    %vm392 = vcmask 80896
    %v393 = vsel %vm392, %v391, %v277
    %vm394 = vcmask 89088
    %v395 = vsel %vm394, %v393, %v307
    %vm396 = vcmask 97280
    %v397 = vsel %vm396, %v395, %v337
    %vm398 = vcmask 105472
    %v399 = vsel %vm398, %v397, %v367
    %vm400 = vcmask 113664
    %401 = vst.msk [vmem:[#allocation8] sm:$0xff] %vm400, %v399
    %v402 = vsel %vm62, %v184, %v220
    %v403 = vsel %vm66, %v402, %v250
    %v404 = vsel %vm70, %v403, %v280
    %v405 = vsel %vm62, %v310, %v340
    %v406 = vsel %vm66, %v405, %v370
    %408 = vrot.lane.b32.xlu0 %v223, 32
    %v409 = vpop.permute.xlu0 %408
    %412 = vrot.lane.b32.xlu0 %v253, 64
    %v413 = vpop.permute.xlu0 %412
    %416 = vrot.lane.b32.xlu0 %v283, 96
    %v417 = vpop.permute.xlu0 %416
    %420 = vrot.lane.b32.xlu0 %v343, 32
    %v421 = vpop.permute.xlu0 %420
    %424 = vrot.lane.b32.xlu0 %v373, 64
    %v425 = vpop.permute.xlu0 %424
    %v427 = vsel %vm62, %v193, %v409
    %v428 = vsel %vm66, %v427, %v413
    %v429 = vsel %vm70, %v428, %v417
    %v430 = vsel %vm62, %v313, %v421
    %v431 = vsel %vm66, %v430, %v425
    %v432 = vmul.f32 %v159, %v404
    %v433 = vmul.f32 %v161, %v406
    %v434 = vadd.f32 %v432, %v429
    %v435 = vadd.f32 %v433, %v431
    %v436 = vld [vmem:[%s2] sm:$0x3]
    %v438 = vlaneseq
    %v439 = vshrl.u32 %v438, 7
    %v440 = vsub.s32 0, %v439
    %v441 = vrot.slane %v436, %v440
    %v442 = vlaneseq
    %v443 = vshrl.u32 %v442, 7
    %v444 = vsub.s32 1, %v443
    %v445 = vrot.slane %v436, %v444
    %v448 = vadd.f32 %v434, %v441
    %v449 = vadd.f32 %v435, %v445
    %451 = vset.pattern.permute.xlu0 0
    %452 = vperm.xlu0 %451, %v40
    %v453 = vpop.permute.xlu0 %452
    %v455 = vmul.f32 %v448, %v453
    %v456 = vmul.f32 %v449, %v453
    %457 = vst [vmem:[#allocation5] sm:$0xff] %v455
    %458 = vst.msk [vmem:[#allocation5 + $0x8] sm:$0xff] %vm70, %v456
    // Predicated region
    $region26: #{tpu_custom_call.1} parent=1 // pred_check
      _
    $region27: #{tpu_custom_call.1} parent=1 // pred_check_branch
      %460 = sbr.rel (0) target = $region29
    $region28: #{tpu_custom_call.1} parent=1 // pred_region
      %s462 = ssub.s32 256, 256
      %463 = vsyncadd [#allocation4], %s462
      %s465 = sshll.u32 [#allocation5], 4
      %s466 = int_to_ptr.vmem [resolvable:$true] %s465
      %468 = dma.vmem_to_hbm [thread:$0]  %s466, 256, %s5, [#allocation4]
    $region29: #{tpu_custom_call.1} parent=1 // pred_fallthru
      _
    // Predicated region
    $region30: #{tpu_custom_call.1} parent=1 // pred_check
      _
    $region31: #{tpu_custom_call.1} parent=1 // pred_check_branch
      %470 = sbr.rel (0) target = $region33
    $region32: #{tpu_custom_call.1} parent=1 // pred_region
      %s472 = ssub.s32 128, 128
      %473 = vsyncadd [#allocation7], %s472
      %s475 = sshll.u32 [#allocation6], 4
      %s476 = int_to_ptr.vmem [resolvable:$true] %s475
      %478 = dma.vmem_to_hbm [thread:$0]  %s476, 128, %s6, [#allocation7]
    $region33: #{tpu_custom_call.1} parent=1 // pred_fallthru
      _
    // Predicated region
    $region34: #{tpu_custom_call.1} parent=1 // pred_check
      _
    $region35: #{tpu_custom_call.1} parent=1 // pred_check_branch
      %480 = sbr.rel (0) target = $region37
    $region36: #{tpu_custom_call.1} parent=1 // pred_region
      %s482 = ssub.s32 128, 128
      %483 = vsyncadd [#allocation7], %s482
      %s485 = sshll.u32 [#allocation8], 4
      %s486 = int_to_ptr.vmem [resolvable:$true] %s485
      %488 = dma.vmem_to_hbm [thread:$0]  %s486, 128, %s7, [#allocation7]
    $region37: #{tpu_custom_call.1} parent=1 // pred_fallthru
      _
    // Predicated region
    $region38: #{tpu_custom_call.1} parent=1 // pred_check
      _
    $region39: #{tpu_custom_call.1} parent=1 // pred_check_branch
      %490 = sbr.rel (0) target = $region41
    $region40: #{tpu_custom_call.1} parent=1 // pred_region
      %491 = dma.done [#allocation4], 256
    $region41: #{tpu_custom_call.1} parent=1 // pred_fallthru
      _
    // Predicated region
    $region42: #{tpu_custom_call.1} parent=1 // pred_check
      _
    $region43: #{tpu_custom_call.1} parent=1 // pred_check_branch
      %493 = sbr.rel (0) target = $region45
    $region44: #{tpu_custom_call.1} parent=1 // pred_region
      %494 = dma.done [#allocation7], 128
    $region45: #{tpu_custom_call.1} parent=1 // pred_fallthru
      _
    // Predicated region
    $region46: #{tpu_custom_call.1} parent=1 // pred_check
      _
    $region47: #{tpu_custom_call.1} parent=1 // pred_check_branch
      %496 = sbr.rel (0) target = $region49
    $region48: #{tpu_custom_call.1} parent=1 // pred_region
      %497 = dma.done [#allocation7], 128
    $region49: #{tpu_custom_call.1} parent=1 // pred_fallthru
      _
    %498 = vsyncpa [#allocation3], 1
    %499 = vsyncpa [#allocation4], 1
    %500 = vsyncpa [#allocation7], 1

</llo_original>
